<compile_context>
chip_gen: v7x
topology: tpu7x:2x2x1
jax: 0.10.0
libtpu: 0.0.40
codegen_flags: <defaults>
</compile_context>

<pallas_src>
import functools

import jax
import jax.numpy as jnp
from jax.experimental import pallas as pl
from jax.experimental.pallas import tpu as pltpu

EPS = 1e-6
_VMEM_LIMIT = 64 * 1024 * 1024  # raise the scoped-VMEM cap (default 16/32 MiB)


def _compiler_params():
    return pltpu.CompilerParams(
        dimension_semantics=("parallel",),   # rows are independent -> megacore
        vmem_limit_bytes=_VMEM_LIMIT,
    )


def _pick_tile_rows(rows: int, d: int, n_streams: int,
                    budget_bytes: int = 32 * 1024 * 1024,
                    max_rows: int = 1024) -> int:
    """Largest row tile whose double-buffered f32 streams fit a VMEM budget."""
    bytes_per_row = max(1, n_streams * 2 * d * 4)   # 2x: pipeline double-buffering
    t = budget_bytes // bytes_per_row
    t = min(int(t), max_rows, rows)
    if t >= rows:
        return rows                       # full-extent block is always legal
    return max(8, (t // 8) * 8)           # keep sublane (8) alignment otherwise


# --------------------------------------------------------------------------
# Kernels
# --------------------------------------------------------------------------
def _layernorm_kernel(alpha_ref, bias_ref, x_ref, o_ref):
    x = x_ref[...].astype(jnp.float32)
    d = x.shape[-1]
    mean = jnp.mean(x, axis=-1, keepdims=True)
    # torch.Tensor.std defaults to the unbiased estimator (ddof = 1).
    var = jnp.sum((x - mean) ** 2, axis=-1, keepdims=True) * (1.0 / (d - 1))
    std = jnp.sqrt(var)
    # One divide per ROW (exact, keeps parity with the torch formula); the
    # per-element work on the (TILE_R, D) tile is then just multiplies.
    inv = 1.0 / (std + EPS)
    y = alpha_ref[0] * (x - mean) * inv + bias_ref[0]
    o_ref[...] = y.astype(o_ref.dtype)


def _residual_add_kernel(x_ref, y_ref, o_ref):
    o_ref[...] = (x_ref[...].astype(jnp.float32)
                  + y_ref[...].astype(jnp.float32)).astype(o_ref.dtype)


def _residual_dropout_kernel(x_ref, y_ref, u_ref, o_ref, *, rate):
    x = x_ref[...].astype(jnp.float32)
    y = y_ref[...].astype(jnp.float32)
    keep = u_ref[...] >= rate                       # inverted dropout
    y = jnp.where(keep, y * (1.0 / (1.0 - rate)), 0.0)
    o_ref[...] = (x + y).astype(o_ref.dtype)


# --------------------------------------------------------------------------
# pallas_call wrappers
# --------------------------------------------------------------------------
def layernorm_pallas(x2d, alpha, bias, *, tile_rows=None):
    rows, d = x2d.shape
    tr = tile_rows or _pick_tile_rows(rows, d, n_streams=2)      # x in + out
    block = pl.BlockSpec((tr, d), lambda i: (i, 0))
    return pl.pallas_call(
        _layernorm_kernel,
        out_shape=jax.ShapeDtypeStruct(x2d.shape, x2d.dtype),
        grid=(pl.cdiv(rows, tr),),
        in_specs=[
            pl.BlockSpec(memory_space=pltpu.MemorySpace.SMEM),   # alpha (1,)
            pl.BlockSpec(memory_space=pltpu.MemorySpace.SMEM),   # bias  (1,)
            block,                                               # x (rows, D)
        ],
        out_specs=block,
        compiler_params=_compiler_params(),
    )(alpha, bias, x2d)


def residual_add_dropout_pallas(x2d, y2d, rate, *, key=None, tile_rows=None):
    rows, d = x2d.shape
    rate = float(rate)

    if rate <= 0.0:
        tr = tile_rows or _pick_tile_rows(rows, d, n_streams=3)  # x, y, out
        block = pl.BlockSpec((tr, d), lambda i: (i, 0))
        return pl.pallas_call(
            _residual_add_kernel,
            out_shape=jax.ShapeDtypeStruct(x2d.shape, x2d.dtype),
            grid=(pl.cdiv(rows, tr),),
            in_specs=[block, block],
            out_specs=block,
            input_output_aliases={0: 0},      # output reuses x's HBM buffer
            compiler_params=_compiler_params(),
        )(x2d, y2d)

    if key is None:
        raise ValueError("dropout rate > 0 requires a PRNG key")
    if rate >= 1.0:
        raise ValueError("dropout rate must be < 1")

    # Dropout uniforms generated outside the kernel (portable: pltpu.prng_* has
    # no CPU/interpret lowering) and streamed in tile-by-tile like x / y.
    u2d = jax.random.uniform(key, x2d.shape, dtype=jnp.float32)

    tr = tile_rows or _pick_tile_rows(rows, d, n_streams=4)      # x, y, u, out
    block = pl.BlockSpec((tr, d), lambda i: (i, 0))
    kernel = functools.partial(_residual_dropout_kernel, rate=rate)
    return pl.pallas_call(
        kernel,
        out_shape=jax.ShapeDtypeStruct(x2d.shape, x2d.dtype),
        grid=(pl.cdiv(rows, tr),),
        in_specs=[block, block, block],
        out_specs=block,
        input_output_aliases={0: 0},
        compiler_params=_compiler_params(),
    )(x2d, y2d, u2d)


# --------------------------------------------------------------------------
# Module
# --------------------------------------------------------------------------
class ResidualConnection:
    """Pallas-backed equivalent of the PyTorch ResidualConnection module."""

    def __init__(self, dropout: float):
        self.dropout = float(dropout)
        # LayerNormalization parameters: scalar alpha = 1, scalar bias = 0.
        self.alpha = jnp.ones((1,), jnp.float32)
        self.bias = jnp.zeros((1,), jnp.float32)

    def __call__(self, x, sublayer, *, key=None, training=True):
        B, S, D = x.shape
        x2d = x.reshape(B * S, D)

        normed = layernorm_pallas(x2d, self.alpha, self.bias).reshape(B, S, D)

        # Glue: arbitrary sublayer callable, applied in plain JAX.
        sub_out = sublayer(normed)
        assert sub_out.shape == x.shape

        rate = self.dropout if training else 0.0
        out2d = residual_add_dropout_pallas(
            x2d, sub_out.reshape(B * S, D).astype(x.dtype), rate, key=key)
        return out2d.reshape(B, S, D)


if __name__ == "__main__":
    B, S, D = 2, 8, 32   # TODO(synk): real transformer D (>=512) is lane-dense; D=32 demo wastes lanes.

    key = jax.random.PRNGKey(0)
    kx, kw, kb, kdrop = jax.random.split(key, 4)
    x = jax.random.normal(kx, (B, S, D), dtype=jnp.float32)

    # Deterministic "sublayer": a simple linear projection D -> D.
    W = jax.random.normal(kw, (D, D), dtype=jnp.float32) * (1.0 / jnp.sqrt(D))
    b = jax.random.normal(kb, (D,), dtype=jnp.float32) * 0.01
    sublayer = lambda h: jnp.einsum("bsd,de->bse", h, W) + b

    block = ResidualConnection(dropout=0.1)

    # Training path (dropout active).
    out_train = block(x, sublayer, key=kdrop, training=True)
    jax.block_until_ready(out_train)
    assert out_train.shape == (B, S, D)
    assert out_train.dtype == x.dtype
    assert bool(jnp.isfinite(out_train).all())

    # Eval path (no dropout) checked against a pure-JAX reference.
    out_eval = block(x, sublayer, training=False)
    jax.block_until_ready(out_eval)
    mean = jnp.mean(x, axis=-1, keepdims=True)
    std = jnp.std(x, axis=-1, keepdims=True, ddof=1)   # unbiased, like torch.Tensor.std
    ref = x + sublayer((x - mean) / (std + EPS))
    err = float(jnp.max(jnp.abs(out_eval - ref)))
    assert jnp.allclose(out_eval, ref, atol=1e-4, rtol=1e-4), err

    print("KERNEL_OK")
</pallas_src>

<mosaic_0001>
module attributes {stable_mosaic.version = 11 : i64} {
  func.func @_layernorm_kernel(%arg0: i32, %arg1: memref<1xf32, #tpu.memory_space<smem>>, %arg2: memref<1xf32, #tpu.memory_space<smem>>, %arg3: memref<16x32xf32, #tpu.memory_space<vmem>>, %arg4: memref<16x32xf32, #tpu.memory_space<vmem>>) attributes {dimension_semantics = [#tpu.dimension_semantics<parallel>], iteration_bounds = array<i64: 1>, scalar_prefetch = 0 : i64, scratch_operands = 0 : i64, tpu.core_type = #tpu.core_type<tc>, window_params = [{transform_indices = @transform_0, window_bounds = array<i64: 1>}, {transform_indices = @transform_1, window_bounds = array<i64: 1>}, {transform_indices = @transform_2, window_bounds = array<i64: 16, 32>}, {transform_indices = @transform_3, window_bounds = array<i64: 16, 32>}]} {
    %c0 = arith.constant 0 : index
    %c0_0 = arith.constant 0 : index
    %0 = vector.load %arg3[%c0, %c0_0] : memref<16x32xf32, #tpu.memory_space<vmem>>, vector<16x32xf32>
    %cst = arith.constant dense<0.000000e+00> : vector<16xf32>
    %1 = vector.multi_reduction <add>, %0, %cst [1] : vector<16x32xf32> to vector<16xf32>
    %2 = vector.shape_cast %1 : vector<16xf32> to vector<16x1xf32>
    %cst_1 = arith.constant 3.200000e+01 : f32
    %3 = vector.broadcast %cst_1 : f32 to vector<16x1xf32>
    %4 = arith.divf %2, %3 : vector<16x1xf32>
    %5 = vector.broadcast %4 : vector<16x1xf32> to vector<16x32xf32>
    %6 = arith.subf %0, %5 : vector<16x32xf32>
    %7 = arith.mulf %6, %6 : vector<16x32xf32>
    %cst_2 = arith.constant dense<0.000000e+00> : vector<16xf32>
    %8 = vector.multi_reduction <add>, %7, %cst_2 [1] : vector<16x32xf32> to vector<16xf32>
    %9 = vector.shape_cast %8 : vector<16xf32> to vector<16x1xf32>
    %cst_3 = arith.constant 0.0322580636 : f32
    %10 = vector.broadcast %cst_3 : f32 to vector<16x1xf32>
    %11 = arith.mulf %9, %10 : vector<16x1xf32>
    %12 = math.sqrt %11 : vector<16x1xf32>
    %cst_4 = arith.constant 9.99999997E-7 : f32
    %13 = vector.broadcast %cst_4 : f32 to vector<16x1xf32>
    %14 = arith.addf %12, %13 : vector<16x1xf32>
    %cst_5 = arith.constant 1.000000e+00 : f32
    %15 = vector.broadcast %cst_5 : f32 to vector<16x1xf32>
    %16 = arith.divf %15, %14 : vector<16x1xf32>
    %c0_6 = arith.constant 0 : index
    %17 = memref.load %arg1[%c0_6] : memref<1xf32, #tpu.memory_space<smem>>
    %18 = vector.broadcast %4 : vector<16x1xf32> to vector<16x32xf32>
    %19 = arith.subf %0, %18 : vector<16x32xf32>
    %20 = vector.broadcast %17 : f32 to vector<16x32xf32>
    %21 = arith.mulf %20, %19 : vector<16x32xf32>
    %22 = vector.broadcast %16 : vector<16x1xf32> to vector<16x32xf32>
    %23 = arith.mulf %21, %22 : vector<16x32xf32>
    %c0_7 = arith.constant 0 : index
    %24 = memref.load %arg2[%c0_7] : memref<1xf32, #tpu.memory_space<smem>>
    %25 = vector.broadcast %24 : f32 to vector<16x32xf32>
    %26 = arith.addf %23, %25 : vector<16x32xf32>
    %c0_8 = arith.constant 0 : index
    %c0_9 = arith.constant 0 : index
    %27 = vector.load %arg4[%c0_8, %c0_9] : memref<16x32xf32, #tpu.memory_space<vmem>>, vector<16x32xf32>
    tpu.vector_store %arg4[%c0_8, %c0_9], %26 {strides = array<i32>} : memref<16x32xf32, #tpu.memory_space<vmem>>, vector<16x32xf32>,
    return
  }
  func.func @transform_0(%arg0: i32) -> i32 {
    %c0_i32 = arith.constant 0 : i32
    %c0_i32_0 = arith.constant 0 : i32
    return %c0_i32 : i32
  }
  func.func @transform_1(%arg0: i32) -> i32 {
    %c0_i32 = arith.constant 0 : i32
    %c0_i32_0 = arith.constant 0 : i32
    return %c0_i32 : i32
  }
  func.func @transform_2(%arg0: i32) -> (i32, i32) {
    %c0_i32 = arith.constant 0 : i32
    %c0_i32_0 = arith.constant 0 : i32
    return %arg0, %c0_i32 : i32, i32
  }
  func.func @transform_3(%arg0: i32) -> (i32, i32) {
    %c0_i32 = arith.constant 0 : i32
    %c0_i32_0 = arith.constant 0 : i32
    return %arg0, %c0_i32 : i32, i32
  }
}

</mosaic_0001>

<llo_original>
// kernel: tpu_custom_call.1
$region0: #{tpu_custom_call.1}
  #allocation0 [shape = 'u32[]', space=smem, size = 0x4, offset = 0x4, fixed_abs, tag = 'smem constant byte address 0x4 - core index']
  #allocation1 [shape = 'u32[144,128]{1,0:T(1,128)}', space=vmem, size = 0x12000, scoped, tag = 'internal scratch']
  #allocation2 [shape = 'f32[1]{0:T(128)S(6)}', space=smem, size = 0x200, scoped, tag = 'scoped memory for tpu_custom_call.1']
  #allocation3 [shape = 'f32[1]{0:T(128)S(6)}', space=smem, size = 0x200, scoped, tag = 'scoped memory for tpu_custom_call.1']
  %s0 = inlined_call_operand.<no memory space> [shape: f32[1], index: 0, kind: input, shape index: {}]
  %s1 = inlined_call_operand.<no memory space> [shape: f32[1], index: 1, kind: input, shape index: {}]
  %s2 = inlined_call_operand.hbm [shape: f32[16,32], index: 2, kind: input, shape index: {}]
  %s3 = inlined_call_operand.hbm [shape: f32[16,32], index: 3, kind: output, shape index: {}]
  %s4 = sld [smem:[#allocation0]]
  $region26: #{tpu_custom_call.1} parent=0
    _
  %s6 = ssub.s32 1, %s4
  %s7 = scalar_select 0, %s6, %s4
  %8 = sst [smem:[#allocation2]] %s0
  %9 = sst [smem:[#allocation3]] %s1
  $region1: #{tpu_custom_call.1} parent=0
    #allocation4 [shape = 'u8[8192]{0}', space=vmem, size = 0x2000, scoped, tag = 'input window, operand 2, single buffered']
    #allocation5 [shape = 's32[1]{0}', space=sflag, size = 0x4, scoped, tag = 'scoped memory for tpu_custom_call.1']
    #allocation6 [shape = 's32[1]{0}', space=sflag, size = 0x4, scoped, tag = 'scoped memory for tpu_custom_call.1']
    #allocation7 [shape = 'u8[8192]{0}', space=vmem, size = 0x2000, scoped, tag = 'output window, operand 0, single buffered']
    %10 = vsyncpa [#allocation5], 0
    %11 = vsyncpa [#allocation6], 0
    // Predicated region
    $region2: #{tpu_custom_call.1} parent=1 // pred_check
      _
    $region3: #{tpu_custom_call.1} parent=1 // pred_check_branch
      %13 = sbr.rel (0) target = $region5
    $region4: #{tpu_custom_call.1} parent=1 // pred_region
      _
    $region5: #{tpu_custom_call.1} parent=1 // pred_fallthru
      _
    // Predicated region
    $region6: #{tpu_custom_call.1} parent=1 // pred_check
      _
    $region7: #{tpu_custom_call.1} parent=1 // pred_check_branch
      %15 = sbr.rel (0) target = $region9
    $region8: #{tpu_custom_call.1} parent=1 // pred_region
      _
    $region9: #{tpu_custom_call.1} parent=1 // pred_fallthru
      _
    // Predicated region
    $region10: #{tpu_custom_call.1} parent=1 // pred_check
      _
    $region11: #{tpu_custom_call.1} parent=1 // pred_check_branch
      %17 = sbr.rel (0) target = $region13
    $region12: #{tpu_custom_call.1} parent=1 // pred_region
      %s19 = ssub.s32 256, 256
      %20 = vsyncadd [#allocation5], %s19
      %s21 = sshll.u32 [#allocation4], 4
      %s22 = int_to_ptr.vmem [resolvable:$true] %s21
      %27 = dma.hbm_to_vmem [thread:$0]  %s2, 256, %s22, [#allocation5], 128, 128, 8
    $region13: #{tpu_custom_call.1} parent=1 // pred_fallthru
      _
    // Predicated region
    $region14: #{tpu_custom_call.1} parent=1 // pred_check
      _
    $region15: #{tpu_custom_call.1} parent=1 // pred_check_branch
      %29 = sbr.rel (0) target = $region17
    $region16: #{tpu_custom_call.1} parent=1 // pred_region
      %30 = dma.done [#allocation5], 256
    $region17: #{tpu_custom_call.1} parent=1 // pred_fallthru
      _
    %v31 = vld [vmem:[#allocation4] sm:$0xff]
    %v32 = vld [vmem:[#allocation4 + $0x8] sm:$0xff]
    %vm33 = vcmask 261120
    %v34 = vsel %vm33, %v31, 0.0
    %35 = vadd.xlane.f32.xlu0 %v34
    %v36 = vpop.xlane.xlu0 %35
    %v37 = vsel %vm33, %v32, 0.0
    %38 = vadd.xlane.f32.xlu0 %v37
    %v39 = vpop.xlane.xlu0 %38
    %v40 = vrcp.pop 32.0
    %v41 = vmul.f32 %v36, %v40
    %v42 = vmul.f32 %v39, %v40
    %v43 = vsub.f32 %v31, %v41
    %v44 = vsub.f32 %v32, %v42
    %v45 = vmul.f32 %v43, %v43
    %v46 = vmul.f32 %v44, %v44
    %v47 = vsel %vm33, %v45, 0.0
    %48 = vadd.xlane.f32.xlu0 %v47
    %v49 = vpop.xlane.xlu0 %48
    %v50 = vsel %vm33, %v46, 0.0
    %51 = vadd.xlane.f32.xlu0 %v50
    %v52 = vpop.xlane.xlu0 %51
    %v53 = vmul.f32 %v49, 0.032258064
    %v54 = vmul.f32 %v52, 0.032258064
    %v55 = vrsqrt.pop %v53
    %v56 = vmul.f32 %v53, %v55
    %vm57 = vcmp.eq.f32.partialorder %v53, inf
    %v58 = vsel %vm57, %v53, %v56
    %vm59 = vcmp.eq.f32.partialorder %v53, 0.0
    %v60 = vand.u32 %v53, 2147483648
    %v61 = vsel %vm59, %v60, %v58
    %v62 = vrsqrt.pop %v54
    %v63 = vmul.f32 %v54, %v62
    %vm64 = vcmp.eq.f32.partialorder %v54, inf
    %v65 = vsel %vm64, %v54, %v63
    %vm66 = vcmp.eq.f32.partialorder %v54, 0.0
    %v67 = vand.u32 %v54, 2147483648
    %v68 = vsel %vm66, %v67, %v65
    %v69 = vadd.f32 %v61, 1e-06
    %v70 = vadd.f32 %v68, 1e-06
    %v71 = vrcp.pop %v69
    %v72 = vmul.f32 1.0, %v71
    %v73 = vrcp.pop %v70
    %v74 = vmul.f32 1.0, %v73
    %s75 = sld [smem:[#allocation2]]
    %v76 = vstv %s75
    %v77 = vmul.f32 %v76, %v43
    %v78 = vmul.f32 %v76, %v44
    %v79 = vmul.f32 %v77, %v72
    %v80 = vmul.f32 %v78, %v74
    %s81 = sld [smem:[#allocation3]]
    %v82 = vstv %s81
    %v83 = vadd.f32 %v79, %v82
    %v84 = vadd.f32 %v80, %v82
    %85 = vst.msk [vmem:[#allocation7] sm:$0xff] %vm33, %v83
    %86 = vst.msk [vmem:[#allocation7 + $0x8] sm:$0xff] %vm33, %v84
    // Predicated region
    $region18: #{tpu_custom_call.1} parent=1 // pred_check
      _
    $region19: #{tpu_custom_call.1} parent=1 // pred_check_branch
      %88 = sbr.rel (0) target = $region21
    $region20: #{tpu_custom_call.1} parent=1 // pred_region
      %s90 = ssub.s32 256, 256
      %91 = vsyncadd [#allocation6], %s90
      %s92 = sshll.u32 [#allocation7], 4
      %s93 = int_to_ptr.vmem [resolvable:$true] %s92
      %98 = dma.vmem_to_hbm [thread:$0]  %s93, 256, %s3, [#allocation6], 128, 128, 8
    $region21: #{tpu_custom_call.1} parent=1 // pred_fallthru
      _
    // Predicated region
    $region22: #{tpu_custom_call.1} parent=1 // pred_check
      _
    $region23: #{tpu_custom_call.1} parent=1 // pred_check_branch
      %100 = sbr.rel (0) target = $region25
    $region24: #{tpu_custom_call.1} parent=1 // pred_region
      %101 = dma.done [#allocation6], 256
    $region25: #{tpu_custom_call.1} parent=1 // pred_fallthru
      _
    %102 = vsyncpa [#allocation5], 1
    %103 = vsyncpa [#allocation6], 1

</llo_original>
